<compile_context>
chip_gen: v6e
topology: v6e:2x2x1
jax: 0.10.0
libtpu: 0.0.40
codegen_flags: <defaults>
</compile_context>

<pallas_src>
import functools
import math

import jax
import jax.numpy as jnp
from jax.experimental import pallas as pl
from jax.experimental.pallas import tpu as pltpu


def _default_vmem_limit():
    # v5e/v6e have 128 MiB VMEM, v7x only 64 MiB; use ~3/4 of physical with headroom
    # for compiler scratch, capped so a v6e-sized budget never OOMs a v7x.
    try:
        cap = int(pltpu.get_tpu_info().vmem_capacity_bytes)
    except Exception:
        cap = 64 * 1024 * 1024
    return min((cap * 3) // 4, 100 * 1024 * 1024)


_VMEM_LIMIT = _default_vmem_limit()


def _pick_sublane_tile(dim, target, align=16):
    """Largest multiple of `align` (16 => bf16 sublane packing) that divides `dim`
    and is <= target; falls back to the full dim (always a legal block)."""
    if dim <= target:
        return dim
    t = (target // align) * align
    while t >= align:
        if dim % t == 0:
            return t
        t -= align
    return dim


def _pick_lane_tile(dim, target):
    """Lane-axis tile: prefer 256-multiples (v6e/v7x MXU fill), then 128-multiples,
    else full extent (full-extent blocks are always legal)."""
    if dim <= target:
        return dim
    for align in (256, 128):
        t = (target // align) * align
        while t >= align:
            if dim % t == 0:
                return t
            t -= align
    return dim


# ----------------------------------------------------------------------------
# Matmul + bias (+ optional GELU) kernel body (shared by QKV proj & FFN-in).
# ----------------------------------------------------------------------------
def _linear_kernel(x_ref, w_ref, b_ref, o_ref, acc_ref, *, activation):
    @pl.when(pl.program_id(2) == 0)
    def _init():
        acc_ref[...] = jnp.zeros_like(acc_ref)

    acc_ref[...] += jnp.dot(
        x_ref[...].astype(w_ref.dtype), w_ref[...],
        preferred_element_type=jnp.float32)

    @pl.when(pl.program_id(2) == pl.num_programs(2) - 1)
    def _finalize():
        y = acc_ref[...] + b_ref[...].astype(jnp.float32)
        if activation == "gelu":
            # TODO(synk): HF 'gelu' is the exact erf form; the tanh approximation is
            # used (reference below matches it), erf has no guaranteed Mosaic lowering.
            c = math.sqrt(2.0 / math.pi)
            y = 0.5 * y * (1.0 + jnp.tanh(c * (y + 0.044715 * y * y * y)))
        o_ref[...] = y.astype(o_ref.dtype)


def pallas_linear(x, w, b, activation=None, *, tm=512, tn=512, tk=1024):
    """x: [M, K] (bf16) @ w: [K, N] (bf16) + b: [1, N], optional fused GELU."""
    M, K = x.shape
    Kw, N = w.shape
    assert K == Kw
    tm = _pick_sublane_tile(M, tm)
    tn = _pick_lane_tile(N, tn)
    tk = _pick_lane_tile(K, tk)
    grid = (M // tm, N // tn, K // tk)
    return pl.pallas_call(
        functools.partial(_linear_kernel, activation=activation),
        out_shape=jax.ShapeDtypeStruct((M, N), x.dtype),
        grid=grid,
        in_specs=[
            pl.BlockSpec((tm, tk), lambda i, j, k: (i, k)),
            pl.BlockSpec((tk, tn), lambda i, j, k: (k, j)),
            pl.BlockSpec((1, tn), lambda i, j, k: (0, j)),
        ],
        out_specs=pl.BlockSpec((tm, tn), lambda i, j, k: (i, j)),
        scratch_shapes=[pltpu.VMEM((tm, tn), jnp.float32)],
        compiler_params=pltpu.CompilerParams(
            dimension_semantics=("parallel", "parallel", "arbitrary"),
            vmem_limit_bytes=_VMEM_LIMIT,
        ),
    )(x, w, b)


def pallas_qkv_proj(x, w, b, *, tm=512, tk=1024):
    """Fused QKV projection.

    x: [M, H] bf16, w: [3, H, H] bf16 (Q already scaled by 1/sqrt(D)), b: [3, 1, H].
    Output: [3, M, H] bf16 — Q/K/V already separated, no wrapper-level split needed.
    """
    M, K = x.shape
    G, Kw, H = w.shape
    assert K == Kw and G == 3
    tm = _pick_sublane_tile(M, tm)
    tk = _pick_lane_tile(K, tk)
    grid = (M // tm, G, K // tk)
    return pl.pallas_call(
        functools.partial(_linear_kernel, activation=None),
        out_shape=jax.ShapeDtypeStruct((G, M, H), x.dtype),
        grid=grid,
        in_specs=[
            pl.BlockSpec((tm, tk), lambda i, j, k: (i, k)),
            pl.BlockSpec((pl.Squeezed(), tk, H), lambda i, j, k: (j, k, 0)),
            pl.BlockSpec((pl.Squeezed(), 1, H), lambda i, j, k: (j, 0, 0)),
        ],
        out_specs=pl.BlockSpec((pl.Squeezed(), tm, H), lambda i, j, k: (j, i, 0)),
        scratch_shapes=[pltpu.VMEM((tm, H), jnp.float32)],
        compiler_params=pltpu.CompilerParams(
            dimension_semantics=("parallel", "parallel", "arbitrary"),
            vmem_limit_bytes=_VMEM_LIMIT,
        ),
    )(x, w, b)


# ----------------------------------------------------------------------------
# Self-attention: grid (B, S//tq); all heads processed in-kernel so loads and the
# context store are lane-dense (tq, H) slabs and the output is already [B, S, H].
# ----------------------------------------------------------------------------
def _attention_kernel(q_ref, k_ref, v_ref, m_ref, o_ref, *, num_heads):
    # q_ref: (tq, H) bf16 (Q pre-scaled by 1/sqrt(D) via the folded weight)
    # k_ref, v_ref: (S, H) bf16;  m_ref: (1, S) f32 additive key mask;  o_ref: (tq, H)
    hdim = q_ref.shape[-1]
    d = hdim // num_heads
    mask = m_ref[...].astype(jnp.float32)                 # (1, S)
    # TODO(synk): attention-probs dropout / head_mask skipped (eval mode, None).
    for h in range(num_heads):                            # static unroll over heads
        sl = slice(h * d, (h + 1) * d)
        s = jax.lax.dot_general(                          # (tq, S) = Q_h @ K_h^T
            q_ref[:, sl], k_ref[:, sl],
            (((1,), (1,)), ((), ())),
            preferred_element_type=jnp.float32)
        s = s + mask                                      # key-only additive mask
        s = s - jnp.max(s, axis=-1, keepdims=True)
        p = jnp.exp(s)
        p = p * pl.reciprocal(jnp.sum(p, axis=-1, keepdims=True), approx=True)
        ctx = jnp.dot(p.astype(v_ref.dtype), v_ref[:, sl],
                      preferred_element_type=jnp.float32)
        o_ref[:, sl] = ctx.astype(o_ref.dtype)            # lands in [B, S, H] layout


def pallas_attention(qkv, mask, *, num_heads, tq=128):
    """qkv: [3, B, S, H] (from pallas_qkv_proj); mask: [B, 1, S] additive key mask.

    Returns context as [B, S, H] — directly consumable by the attn-out matmul.
    """
    _, B, S, H = qkv.shape
    tq = _pick_sublane_tile(S, tq)
    grid = (B, S // tq)
    q_spec = pl.BlockSpec((pl.Squeezed(), pl.Squeezed(), tq, H),
                          lambda b, qi: (0, b, qi, 0))
    k_spec = pl.BlockSpec((pl.Squeezed(), pl.Squeezed(), S, H),
                          lambda b, qi: (1, b, 0, 0))
    v_spec = pl.BlockSpec((pl.Squeezed(), pl.Squeezed(), S, H),
                          lambda b, qi: (2, b, 0, 0))
    m_spec = pl.BlockSpec((pl.Squeezed(), 1, S), lambda b, qi: (b, 0, 0))
    o_spec = pl.BlockSpec((pl.Squeezed(), tq, H), lambda b, qi: (b, qi, 0))
    return pl.pallas_call(
        functools.partial(_attention_kernel, num_heads=num_heads),
        out_shape=jax.ShapeDtypeStruct((B, S, H), qkv.dtype),
        grid=grid,
        in_specs=[q_spec, k_spec, v_spec, m_spec],
        out_specs=o_spec,
        compiler_params=pltpu.CompilerParams(
            dimension_semantics=("parallel", "parallel"),
            vmem_limit_bytes=_VMEM_LIMIT,
        ),
    )(qkv, qkv, qkv, mask)


# ----------------------------------------------------------------------------
# Matmul + bias + residual-add + LayerNorm fused kernel (tn = full H so the whole
# output row is resident in the f32 accumulator; LN is epilogue work under the MXU).
# ----------------------------------------------------------------------------
def _linear_add_ln_kernel(x_ref, w_ref, b_ref, r_ref, g_ref, bb_ref, o_ref,
                          acc_ref, *, eps):
    @pl.when(pl.program_id(1) == 0)
    def _init():
        acc_ref[...] = jnp.zeros_like(acc_ref)

    acc_ref[...] += jnp.dot(
        x_ref[...].astype(w_ref.dtype), w_ref[...],
        preferred_element_type=jnp.float32)

    @pl.when(pl.program_id(1) == pl.num_programs(1) - 1)
    def _finalize():
        y = (acc_ref[...] + b_ref[...].astype(jnp.float32)
             + r_ref[...].astype(jnp.float32))
        mean = jnp.mean(y, axis=-1, keepdims=True)
        yc = y - mean
        var = jnp.mean(yc * yc, axis=-1, keepdims=True)
        inv = jax.lax.rsqrt(var + eps)
        out = (yc * inv * g_ref[...].astype(jnp.float32)
               + bb_ref[...].astype(jnp.float32))
        o_ref[...] = out.astype(o_ref.dtype)


def pallas_linear_add_layernorm(x, w, b, residual, gamma, beta, *, eps,
                                out_dtype, tm=512, tk=1024):
    """LayerNorm(x @ w + b + residual) with w: [K, H]; N-tile = full H."""
    M, K = x.shape
    Kw, H = w.shape
    assert K == Kw and residual.shape == (M, H)
    tm = _pick_sublane_tile(M, tm)
    tk = _pick_lane_tile(K, tk)
    grid = (M // tm, K // tk)
    return pl.pallas_call(
        functools.partial(_linear_add_ln_kernel, eps=eps),
        out_shape=jax.ShapeDtypeStruct((M, H), out_dtype),
        grid=grid,
        in_specs=[
            pl.BlockSpec((tm, tk), lambda i, k: (i, k)),
            pl.BlockSpec((tk, H), lambda i, k: (k, 0)),
            pl.BlockSpec((1, H), lambda i, k: (0, 0)),
            pl.BlockSpec((tm, H), lambda i, k: (i, 0)),
            pl.BlockSpec((1, H), lambda i, k: (0, 0)),
            pl.BlockSpec((1, H), lambda i, k: (0, 0)),
        ],
        out_specs=pl.BlockSpec((tm, H), lambda i, k: (i, 0)),
        scratch_shapes=[pltpu.VMEM((tm, H), jnp.float32)],
        compiler_params=pltpu.CompilerParams(
            dimension_semantics=("parallel", "arbitrary"),
            vmem_limit_bytes=_VMEM_LIMIT,
        ),
    )(x, w, b, residual, gamma, beta)


# ----------------------------------------------------------------------------
# BertLayer forward
# ----------------------------------------------------------------------------
def bert_layer_forward(hidden_states, params, attention_mask=None):
    """hidden_states: [B, S, H]; attention_mask: HF additive key mask [B,1,1,S] or None.

    Eval-mode encoder BertLayer. Dropout = identity; decoder KV cache, cross-attention,
    head_mask and relative position embeddings are not implemented.
    """
    B, S, H = hidden_states.shape
    NH = params["num_heads"]
    eps = params["layer_norm_eps"]
    cdt = params["qkv_w"].dtype  # compute dtype for activations (bf16)

    x2d = hidden_states.reshape(B * S, H).astype(cdt)

    # --- self-attention -------------------------------------------------------
    qkv = pallas_qkv_proj(x2d, params["qkv_w"], params["qkv_b"])   # [3, M, H]
    qkv4 = qkv.reshape(3, B, S, H)                                  # free reshape

    if attention_mask is None:
        mask = jnp.zeros((B, 1, S), dtype=jnp.float32)
    else:
        am = jnp.asarray(attention_mask, dtype=jnp.float32)
        if am.ndim == 4 and am.shape[1] == 1 and am.shape[2] == 1:
            mask = am.reshape(B, 1, S)          # HF extended mask [B,1,1,S]
        elif am.ndim == 2:
            mask = am.reshape(B, 1, S)
        else:
            # TODO(synk): full [B,1,S,S] causal/extended masks not supported here.
            raise NotImplementedError("only key-only additive masks are supported")

    ctx = pallas_attention(qkv4, mask, num_heads=NH)                # [B, S, H]
    ctx2d = ctx.reshape(B * S, H)

    attn = pallas_linear_add_layernorm(
        ctx2d, params["attn_out_w"], params["attn_out_b"], x2d,
        params["ln1_g"], params["ln1_b"], eps=eps, out_dtype=cdt)   # [M, H]

    # --- feed-forward ---------------------------------------------------------
    inter = pallas_linear(attn, params["ffn_in_w"], params["ffn_in_b"],
                          activation="gelu")                        # [M, I]
    out = pallas_linear_add_layernorm(
        inter, params["ffn_out_w"], params["ffn_out_b"], attn,
        params["ln2_g"], params["ln2_b"], eps=eps,
        out_dtype=hidden_states.dtype)                              # [M, H]

    return out.reshape(B, S, H)


# ----------------------------------------------------------------------------
# Parameter construction (one-time layout / dtype change, simulates model load)
# ----------------------------------------------------------------------------
def init_params(key, hidden_size, num_heads, intermediate_size,
                layer_norm_eps=1e-12, param_dtype=jnp.bfloat16):
    H, I = hidden_size, intermediate_size
    D = H // num_heads
    keys = jax.random.split(key, 12)

    def linear(kw, kb, out_dim, in_dim):
        w = jax.random.normal(kw, (out_dim, in_dim), jnp.float32) * 0.02  # torch [out, in]
        b = jax.random.normal(kb, (out_dim,), jnp.float32) * 0.02
        return w, b

    q_w, q_b = linear(keys[0], keys[1], H, H)
    k_w, k_b = linear(keys[2], keys[3], H, H)
    v_w, v_b = linear(keys[4], keys[5], H, H)
    o_w, o_b = linear(keys[6], keys[7], H, H)
    i_w, i_b = linear(keys[8], keys[9], I, H)
    f_w, f_b = linear(keys[10], keys[11], H, I)

    inv_sqrt_d = 1.0 / math.sqrt(D)
    # One-time re-layout: torch [out, in] -> (in, out); stack Q/K/V as [3, H, H];
    # fold the 1/sqrt(D) attention scale into the Q weight & bias; weights -> bf16.
    return dict(
        num_heads=num_heads,
        layer_norm_eps=layer_norm_eps,
        qkv_w=jnp.stack([q_w.T * inv_sqrt_d, k_w.T, v_w.T], axis=0).astype(param_dtype),
        qkv_b=jnp.stack([q_b * inv_sqrt_d, k_b, v_b], axis=0).reshape(3, 1, H),
        attn_out_w=o_w.T.astype(param_dtype), attn_out_b=o_b.reshape(1, H),
        ffn_in_w=i_w.T.astype(param_dtype), ffn_in_b=i_b.reshape(1, I),
        ffn_out_w=f_w.T.astype(param_dtype), ffn_out_b=f_b.reshape(1, H),
        ln1_g=jnp.ones((1, H), jnp.float32), ln1_b=jnp.zeros((1, H), jnp.float32),
        ln2_g=jnp.ones((1, H), jnp.float32), ln2_b=jnp.zeros((1, H), jnp.float32),
    )


# ----------------------------------------------------------------------------
# Pure-JAX f32 reference (mirrors the PyTorch BertLayer forward in eval mode).
# Uses the same (bf16-rounded, Q-scale-folded) weights so differences come only
# from the kernel's bf16 activations / approx reciprocal.
# ----------------------------------------------------------------------------
def bert_layer_ref(hidden_states, params, attention_mask=None):
    B, S, H = hidden_states.shape
    NH = params["num_heads"]
    D = H // NH
    eps = params["layer_norm_eps"]
    x = hidden_states.reshape(B * S, H).astype(jnp.float32)

    wq, wk, wv = [params["qkv_w"][i].astype(jnp.float32) for i in range(3)]
    bq, bk, bv = [params["qkv_b"][i, 0] for i in range(3)]
    q, k, v = x @ wq + bq, x @ wk + bk, x @ wv + bv   # 1/sqrt(D) already in wq/bq

    def heads(t):
        return t.reshape(B, S, NH, D).transpose(0, 2, 1, 3)

    q, k, v = heads(q), heads(k), heads(v)
    scores = jnp.einsum("bhqd,bhkd->bhqk", q, k)
    if attention_mask is not None:
        scores = scores + attention_mask
    probs = jax.nn.softmax(scores, axis=-1)
    ctx = jnp.einsum("bhqk,bhkd->bhqd", probs, v)
    ctx = ctx.transpose(0, 2, 1, 3).reshape(B * S, H)

    def layer_norm(y, g, b):
        m = y.mean(-1, keepdims=True)
        var = ((y - m) ** 2).mean(-1, keepdims=True)
        return (y - m) * jax.lax.rsqrt(var + eps) * g[0] + b[0]

    attn = layer_norm(
        ctx @ params["attn_out_w"].astype(jnp.float32) + params["attn_out_b"][0] + x,
        params["ln1_g"], params["ln1_b"])
    inter = jax.nn.gelu(
        attn @ params["ffn_in_w"].astype(jnp.float32) + params["ffn_in_b"][0],
        approximate=True)
    out = layer_norm(
        inter @ params["ffn_out_w"].astype(jnp.float32) + params["ffn_out_b"][0] + attn,
        params["ln2_g"], params["ln2_b"])
    return out.reshape(B, S, H)


if __name__ == "__main__":
    B, S, H, NH, I = 2, 8, 32, 4, 128  # batch, seq, hidden, heads, intermediate

    key = jax.random.PRNGKey(0)
    k_x, k_p = jax.random.split(key)
    hidden_states = jax.random.normal(k_x, (B, S, H), dtype=jnp.float32)
    params = init_params(k_p, H, NH, I)

    # HF-style additive attention mask [B, 1, 1, S]: batch 1 masks its last 2 tokens.
    valid = jnp.array([[1.0] * S, [1.0] * (S - 2) + [0.0] * 2], dtype=jnp.float32)
    attention_mask = (1.0 - valid)[:, None, None, :] * -1e9

    out = bert_layer_forward(hidden_states, params, attention_mask)
    out = jax.block_until_ready(out)

    ref = bert_layer_ref(hidden_states, params, attention_mask)
    assert out.shape == (B, S, H)
    max_err = float(jnp.max(jnp.abs(out.astype(jnp.float32) - ref)))
    # bf16 activations + approx softmax reciprocal -> loose-but-safe tolerance
    assert max_err < 3e-2, f"max_err={max_err}"

    print("KERNEL_OK")
</pallas_src>

<mosaic_0001>
module attributes {stable_mosaic.version = 11 : i64} {
  func.func @_linear_kernel(%arg0: i32, %arg1: i32, %arg2: i32, %arg3: memref<16x32xbf16, #tpu.memory_space<vmem>>, %arg4: memref<1x32x32xbf16, #tpu.memory_space<vmem>>, %arg5: memref<1x1x32xf32, #tpu.memory_space<vmem>>, %arg6: memref<1x16x32xbf16, #tpu.memory_space<vmem>>, %arg7: memref<16x32xf32, #tpu.memory_space<vmem>>) attributes {dimension_semantics = [#tpu.dimension_semantics<parallel>, #tpu.dimension_semantics<parallel>, #tpu.dimension_semantics<arbitrary>], iteration_bounds = array<i64: 1, 3, 1>, scalar_prefetch = 0 : i64, scratch_operands = 1 : i64, tpu.core_type = #tpu.core_type<tc>, window_params = [{transform_indices = @transform_0, window_bounds = array<i64: 16, 32>}, {transform_indices = @transform_1, window_bounds = array<i64: 1, 32, 32>}, {transform_indices = @transform_2, window_bounds = array<i64: 1, 1, 32>}, {transform_indices = @transform_3, window_bounds = array<i64: 1, 16, 32>}]} {
    %c0_i32 = arith.constant 0 : i32
    %0 = arith.cmpi eq, %arg2, %c0_i32 : i32
    %1 = arith.extui %0 : i1 to i32
    %c0_i32_0 = arith.constant 0 : i32
    %2 = arith.cmpi ne, %1, %c0_i32_0 : i32
    scf.if %2 {
      %cst_11 = arith.constant 0.000000e+00 : f32
      %13 = vector.broadcast %cst_11 : f32 to vector<16x32xf32>
      %c0_12 = arith.constant 0 : index
      %c0_13 = arith.constant 0 : index
      %14 = vector.load %arg7[%c0_12, %c0_13] : memref<16x32xf32, #tpu.memory_space<vmem>>, vector<16x32xf32>
      tpu.vector_store %arg7[%c0_12, %c0_13], %13 {strides = array<i32>} : memref<16x32xf32, #tpu.memory_space<vmem>>, vector<16x32xf32>,
    } else {
    }
    %c0 = arith.constant 0 : index
    %c0_1 = arith.constant 0 : index
    %3 = vector.load %arg7[%c0, %c0_1] : memref<16x32xf32, #tpu.memory_space<vmem>>, vector<16x32xf32>
    %c0_2 = arith.constant 0 : index
    %c0_3 = arith.constant 0 : index
    %4 = vector.load %arg3[%c0_2, %c0_3] : memref<16x32xbf16, #tpu.memory_space<vmem>>, vector<16x32xbf16>
    %c0_4 = arith.constant 0 : index
    %c0_5 = arith.constant 0 : index
    %c0_6 = arith.constant 0 : index
    %5 = vector.load %arg4[%c0_4, %c0_5, %c0_6] : memref<1x32x32xbf16, #tpu.memory_space<vmem>>, vector<1x32x32xbf16>
    %6 = vector.shape_cast %5 : vector<1x32x32xbf16> to vector<32x32xbf16>
    %cst = arith.constant dense<0.000000e+00> : vector<16x32xf32>
    %7 = tpu.matmul %4, %6, %cst {dimension_numbers = #tpu.dot_dimension_numbers<[1], [0], [0], [1], [0, 0, 1, 1], [], []>} : vector<16x32xbf16>, vector<32x32xbf16>, vector<16x32xf32> -> vector<16x32xf32>
    %8 = arith.addf %3, %7 : vector<16x32xf32>
    %c0_7 = arith.constant 0 : index
    %c0_8 = arith.constant 0 : index
    %9 = vector.load %arg7[%c0_7, %c0_8] : memref<16x32xf32, #tpu.memory_space<vmem>>, vector<16x32xf32>
    tpu.vector_store %arg7[%c0_7, %c0_8], %8 {strides = array<i32>} : memref<16x32xf32, #tpu.memory_space<vmem>>, vector<16x32xf32>,
    %c0_i32_9 = arith.constant 0 : i32
    %10 = arith.cmpi eq, %arg2, %c0_i32_9 : i32
    %11 = arith.extui %10 : i1 to i32
    %c0_i32_10 = arith.constant 0 : i32
    %12 = arith.cmpi ne, %11, %c0_i32_10 : i32
    scf.if %12 {
      %c0_11 = arith.constant 0 : index
      %c0_12 = arith.constant 0 : index
      %13 = vector.load %arg7[%c0_11, %c0_12] : memref<16x32xf32, #tpu.memory_space<vmem>>, vector<16x32xf32>
      %c0_13 = arith.constant 0 : index
      %c0_14 = arith.constant 0 : index
      %c0_15 = arith.constant 0 : index
      %14 = vector.load %arg5[%c0_13, %c0_14, %c0_15] : memref<1x1x32xf32, #tpu.memory_space<vmem>>, vector<1x1x32xf32>
      %15 = vector.shape_cast %14 : vector<1x1x32xf32> to vector<1x32xf32>
      %16 = vector.broadcast %15 : vector<1x32xf32> to vector<16x32xf32>
      %17 = arith.addf %13, %16 : vector<16x32xf32>
      %18 = arith.truncf %17 : vector<16x32xf32> to vector<16x32xbf16>
      %c0_16 = arith.constant 0 : index
      %c0_17 = arith.constant 0 : index
      %c0_18 = arith.constant 0 : index
      %19 = vector.load %arg6[%c0_16, %c0_17, %c0_18] : memref<1x16x32xbf16, #tpu.memory_space<vmem>>, vector<1x16x32xbf16>
      %20 = vector.shape_cast %19 : vector<1x16x32xbf16> to vector<16x32xbf16>
      %21 = vector.shape_cast %18 : vector<16x32xbf16> to vector<1x16x32xbf16>
      tpu.vector_store %arg6[%c0_16, %c0_17, %c0_18], %21 {strides = array<i32>} : memref<1x16x32xbf16, #tpu.memory_space<vmem>>, vector<1x16x32xbf16>,
    } else {
    }
    return
  }
  func.func @transform_0(%arg0: i32, %arg1: i32, %arg2: i32) -> (i32, i32) {
    %c0_i32 = arith.constant 0 : i32
    return %arg0, %arg2 : i32, i32
  }
  func.func @transform_1(%arg0: i32, %arg1: i32, %arg2: i32) -> (i32, i32, i32) {
    %c0_i32 = arith.constant 0 : i32
    %c0_i32_0 = arith.constant 0 : i32
    return %arg1, %arg2, %c0_i32 : i32, i32, i32
  }
  func.func @transform_2(%arg0: i32, %arg1: i32, %arg2: i32) -> (i32, i32, i32) {
    %c0_i32 = arith.constant 0 : i32
    %c0_i32_0 = arith.constant 0 : i32
    %c0_i32_1 = arith.constant 0 : i32
    return %arg1, %c0_i32, %c0_i32_0 : i32, i32, i32
  }
  func.func @transform_3(%arg0: i32, %arg1: i32, %arg2: i32) -> (i32, i32, i32) {
    %c0_i32 = arith.constant 0 : i32
    %c0_i32_0 = arith.constant 0 : i32
    return %arg1, %arg0, %c0_i32 : i32, i32, i32
  }
}

</mosaic_0001>

<llo_original>
// kernel: tpu_custom_call.1
$region0: #{tpu_custom_call.1}
  #allocation0 [shape = 'u32[]', space=smem, size = 0x4, offset = 0x4, fixed_abs, tag = 'smem constant byte address 0x4 - core index']
  #allocation1 [shape = 'u32[144,128]{1,0:T(1,128)}', space=vmem, size = 0x12000, scoped, tag = 'internal scratch']
  #allocation2 [shape = 'f32[16,32]{1,0:T(8,128)}', space=vmem, size = 0x2000, scoped, tag = 'scratch operand']
  %s0 = inlined_call_operand.hbm [shape: bf16[16,32], index: 0, kind: input, shape index: {}]
  %s1 = inlined_call_operand.hbm [shape: bf16[3,32,32], index: 1, kind: input, shape index: {}]
  %s2 = inlined_call_operand.vmem [shape: f32[3,1,32], index: 2, kind: input, shape index: {}]
  %s3 = inlined_call_operand.hbm [shape: bf16[3,16,32], index: 3, kind: output, shape index: {}]
  %s4 = sld [smem:[#allocation0]]
  $region61: #{tpu_custom_call.1} parent=0
    _
  %s6 = ssub.s32 1, %s4
  %s7 = scalar_select 0, %s6, %s4
  $region1: #{tpu_custom_call.1} parent=0
    #allocation3 [shape = 'u8[4096]{0}', space=vmem, size = 0x1000, scoped, tag = 'input window, operand 0, single buffered']
    #allocation4 [shape = 's32[2]{0}', space=sflag, size = 0x8, scoped, tag = 'scoped memory for tpu_custom_call.1']
    #allocation5 [shape = 's32[2]{0}', space=sflag, size = 0x8, scoped, tag = 'scoped memory for tpu_custom_call.1']
    #allocation6 [shape = 'u8[16384]{0}', space=vmem, size = 0x4000, scoped, tag = 'input window, operand 1']
    #allocation7 [shape = 's32[2]{0}', space=sflag, size = 0x8, scoped, tag = 'scoped memory for tpu_custom_call.1']
    #allocation8 [shape = 'u8[8192]{0}', space=vmem, size = 0x2000, scoped, tag = 'output window, operand 0']
    %8 = vsyncpa [#allocation4], 0
    %9 = vsyncpa [#allocation7], 0
    %s10 = scalar_lea.sflag [#allocation7], 1
    %11 = vsyncpa %s10, 0
    %12 = vsyncpa [#allocation5], 0
    %s13 = scalar_lea.sflag [#allocation5], 1
    %14 = vsyncpa %s13, 0
    loop: start=0, step=1, limit=5
    $region2: #{tpu_custom_call.1} parent=1 // loop_pre_header
      _
    $region3: #{tpu_custom_call.1} parent=1 // loop_header
      %s16 = sphi 0, %s20
      %p17 = scmp.ge.s32.totalorder %s16, 5
      %s23 = sphi 0, %s42
      %s24 = sphi 0, %s38
      %s25 = sphi 0, %s34
      %s26 = sphi 0, %s23
      %s27 = sphi 0, %s24
      %s28 = sphi 0, %s25
      %s29 = sphi 0, %s26
      %s30 = sphi 0, %s27
      %s31 = sphi 0, %s28
      %s47 = sphi 0, %s49
      %s50 = sphi 0, %s47
      %s51 = sphi 0, %s50
      %s67 = sphi 0, %s51
      %s75 = sphi 0, %s77
      %s78 = sphi 0, %s75
      %s79 = sphi 0, %s78
      %s95 = sphi 0, %s79
      %s101 = sphi 0, %s103
      %s104 = sphi 0, %s101
      %s105 = sphi 0, %s104
      %s121 = sphi 0, %s105
      %s129 = sphi 0, %s131
      %s132 = sphi 0, %s129
      %s133 = sphi 0, %s132
      %s149 = sphi 0, %s133
    $region4: #{tpu_custom_call.1} parent=1 // loop_header_branch
      %19 = sbr.rel (%p17) target = $region8
    $region5: #{tpu_custom_call.1} parent=1 // loop_body
      %s21 = ssub.s32 %s16, 1
      %s22 = ssub.s32 %s16, 2
      %s32 = sadd.s32 1, %s25
      %p33 = scmp.ge.s32.totalorder %s32, 1
      %s34 = scalar_select %p33, 0, %s32
      %s35 = sadd.s32 1, %s24
      %s36 = scalar_select %p33, %s35, %s24
      %p37 = scmp.ge.s32.totalorder %s36, 3
      %s38 = scalar_select %p37, 0, %s36
      %s39 = sadd.s32 1, %s23
      %s40 = scalar_select %p37, %s39, %s23
      %p41 = scmp.ge.s32.totalorder %s40, 1
      %s42 = scalar_select %p41, 0, %s40
      %s43 = ssub.s32 %s23, %s42
      %s44 = ssub.s32 %s25, %s34
      %s45 = sor.u32 %s43, %s44
      %p46 = scmp.eq.s32.totalorder %s45, 0
      %s48 = sadd.s32 %s47, 1
      %s49 = scalar_select %p46, %s47, %s48
      %p52 = pneg %p46
      %p53 = scmp.eq.s32.totalorder %s16, 2
      %p54 = por %p52, %p53
      %p55 = scmp.ne.s32.totalorder %s47, %s50
      %p56 = scmp.eq.s32.totalorder %s16, 0
      %p57 = por %p55, %p56
      %p58 = scmp.ne.s32.totalorder %s47, %s50
      %p59 = scmp.eq.s32.totalorder %s21, 2
      %p60 = por %p58, %p59
      %p61 = scmp.ne.s32.totalorder %s50, %s51
      %p62 = scmp.eq.s32.totalorder %s21, 0
      %p63 = por %p61, %p62
      %p64 = scmp.ne.s32.totalorder %s50, %s51
      %p65 = scmp.eq.s32.totalorder %s22, 2
      %p66 = por %p64, %p65
      %p68 = scmp.ne.s32.totalorder %s51, %s67
      %p69 = scmp.eq.s32.totalorder %s22, 0
      %p70 = por %p68, %p69
      %s71 = ssub.s32 %s24, %s38
      %s72 = ssub.s32 %s25, %s34
      %s73 = sor.u32 %s71, %s72
      %p74 = scmp.eq.s32.totalorder %s73, 0
      %s76 = sadd.s32 %s75, 1
      %s77 = scalar_select %p74, %s75, %s76
      %p80 = pneg %p74
      %p81 = scmp.eq.s32.totalorder %s16, 2
      %p82 = por %p80, %p81
      %p83 = scmp.ne.s32.totalorder %s75, %s78
      %p84 = scmp.eq.s32.totalorder %s16, 0
      %p85 = por %p83, %p84
      %p86 = scmp.ne.s32.totalorder %s75, %s78
      %p87 = scmp.eq.s32.totalorder %s21, 2
      %p88 = por %p86, %p87
      %p89 = scmp.ne.s32.totalorder %s78, %s79
      %p90 = scmp.eq.s32.totalorder %s21, 0
      %p91 = por %p89, %p90
      %p92 = scmp.ne.s32.totalorder %s78, %s79
      %p93 = scmp.eq.s32.totalorder %s22, 2
      %p94 = por %p92, %p93
      %p96 = scmp.ne.s32.totalorder %s79, %s95
      %p97 = scmp.eq.s32.totalorder %s22, 0
      %p98 = por %p96, %p97
      %s99 = ssub.s32 %s24, %s38
      %p100 = scmp.eq.s32.totalorder %s99, 0
      %s102 = sadd.s32 %s101, 1
      %s103 = scalar_select %p100, %s101, %s102
      %p106 = pneg %p100
      %p107 = scmp.eq.s32.totalorder %s16, 2
      %p108 = por %p106, %p107
      %p109 = scmp.ne.s32.totalorder %s101, %s104
      %p110 = scmp.eq.s32.totalorder %s16, 0
      %p111 = por %p109, %p110
      %p112 = scmp.ne.s32.totalorder %s101, %s104
      %p113 = scmp.eq.s32.totalorder %s21, 2
      %p114 = por %p112, %p113
      %p115 = scmp.ne.s32.totalorder %s104, %s105
      %p116 = scmp.eq.s32.totalorder %s21, 0
      %p117 = por %p115, %p116
      %p118 = scmp.ne.s32.totalorder %s104, %s105
      %p119 = scmp.eq.s32.totalorder %s22, 2
      %p120 = por %p118, %p119
      %p122 = scmp.ne.s32.totalorder %s105, %s121
      %p123 = scmp.eq.s32.totalorder %s22, 0
      %p124 = por %p122, %p123
      %s125 = ssub.s32 %s24, %s38
      %s126 = ssub.s32 %s23, %s42
      %s127 = sor.u32 %s125, %s126
      %p128 = scmp.eq.s32.totalorder %s127, 0
      %s130 = sadd.s32 %s129, 1
      %s131 = scalar_select %p128, %s129, %s130
      %p134 = pneg %p128
      %p135 = scmp.eq.s32.totalorder %s16, 2
      %p136 = por %p134, %p135
      %p137 = scmp.ne.s32.totalorder %s129, %s132
      %p138 = scmp.eq.s32.totalorder %s16, 0
      %p139 = por %p137, %p138
      %p140 = scmp.ne.s32.totalorder %s129, %s132
      %p141 = scmp.eq.s32.totalorder %s21, 2
      %p142 = por %p140, %p141
      %p143 = scmp.ne.s32.totalorder %s132, %s133
      %p144 = scmp.eq.s32.totalorder %s21, 0
      %p145 = por %p143, %p144
      %p146 = scmp.ne.s32.totalorder %s132, %s133
      %p147 = scmp.eq.s32.totalorder %s22, 2
      %p148 = por %p146, %p147
      %p150 = scmp.ne.s32.totalorder %s133, %s149
      %p151 = scmp.eq.s32.totalorder %s22, 0
      %p152 = por %p150, %p151
      %p153 = scmp.le.s32.totalorder 1, %s16
      %p154 = scmp.lt.s32.totalorder %s16, 4
      %p155 = pnand %p153, %p154
      %p156 = pneg %p155
      // Predicated region
      $region9: #{tpu_custom_call.1} parent=5 // pred_check
        _
      $region10: #{tpu_custom_call.1} parent=5 // pred_check_branch
        %158 = sbr.rel (%p155) target = $region12
      $region11: #{tpu_custom_call.1} parent=5 // pred_region
        %s159 = ssub.s32 %s16, 1
        // Predicated region
        $region13: #{tpu_custom_call.1} parent=11 // pred_check
          %p160 = pneg %p63
        $region14: #{tpu_custom_call.1} parent=11 // pred_check_branch
          %162 = sbr.rel (%p160) target = $region16
        $region15: #{tpu_custom_call.1} parent=11 // pred_region
          %s163 = smul.u32 2, %s26
          %s165 = ssub.s32 128, 128
          %166 = vsyncadd [#allocation4], %s165
          %s167 = sadd.s32 %s28, %s163
          %s168 = smul.addr %s167, 64
          %s169 = scalar_lea.hbm %s0, %s168
          %s170 = sshll.u32 [#allocation3], 4
          %s171 = int_to_ptr.vmem [resolvable:$true] %s170
          %176 = dma.hbm_to_vmem [thread:$0]  %s169, 128, %s171, [#allocation4], 64, 64, 4
        $region16: #{tpu_custom_call.1} parent=11 // pred_fallthru
          _
      $region12: #{tpu_custom_call.1} parent=5 // pred_fallthru
        _
      %p177 = scmp.lt.s32.totalorder %s16, 3
      // Predicated region
      $region17: #{tpu_custom_call.1} parent=5 // pred_check
        %p178 = pneg %p177
      $region18: #{tpu_custom_call.1} parent=5 // pred_check_branch
        %180 = sbr.rel (%p178) target = $region20
      $region19: #{tpu_custom_call.1} parent=5 // pred_region
        // Predicated region
        $region21: #{tpu_custom_call.1} parent=19 // pred_check
          %p181 = pneg %p85
        $region22: #{tpu_custom_call.1} parent=19 // pred_check_branch
          %183 = sbr.rel (%p181) target = $region24
        $region23: #{tpu_custom_call.1} parent=19 // pred_region
          %s184 = sand.u32 %s75, 1
          %s185 = scalar_lea.sflag [#allocation7], %s184
          %s186 = sand.u32 %s75, 1
          %s187 = smul.addr %s186, 16
          %s188 = scalar_lea.vmem [#allocation6], %s187
          %s189 = smul.u32 4, %s25
          %s191 = ssub.s32 256, 256
          %192 = vsyncadd %s185, %s191
          %s193 = smul.addr %s24, 4
          %s194 = sadd.s32 %s189, %s193
          %s195 = smul.addr %s194, 64
          %s196 = scalar_lea.hbm %s1, %s195
          %s197 = sshll.u32 %s188, 4
          %s198 = int_to_ptr.vmem [resolvable:$true] %s197
          %203 = dma.hbm_to_vmem [thread:$0]  %s196, 256, %s198, %s185, 64, 64, 4
        $region24: #{tpu_custom_call.1} parent=19 // pred_fallthru
          _
        // Predicated region
        $region25: #{tpu_custom_call.1} parent=19 // pred_check
          %p204 = pneg %p111
        $region26: #{tpu_custom_call.1} parent=19 // pred_check_branch
          %206 = sbr.rel (%p204) target = $region28
        $region27: #{tpu_custom_call.1} parent=19 // pred_region
          %p207 = scmp.lt.s32.totalorder %s24, 2
          %s208 = scalar_select %p207, %s24, 2
          %s209 = scalar_lea.vmem %s2, %s208
        $region28: #{tpu_custom_call.1} parent=19 // pred_fallthru
          _
      $region20: #{tpu_custom_call.1} parent=5 // pred_fallthru
        _
      %p210 = scmp.le.s32.totalorder 1, %s16
      %p211 = scmp.lt.s32.totalorder %s16, 4
      %p212 = pnand %p210, %p211
      %p213 = pneg %p212
      // Predicated region
      $region29: #{tpu_custom_call.1} parent=5 // pred_check
        _
      $region30: #{tpu_custom_call.1} parent=5 // pred_check_branch
        %215 = sbr.rel (%p212) target = $region32
      $region31: #{tpu_custom_call.1} parent=5 // pred_region
        %s216 = ssub.s32 %s16, 1
        // Predicated region
        $region33: #{tpu_custom_call.1} parent=31 // pred_check
          %p217 = pneg %p63
        $region34: #{tpu_custom_call.1} parent=31 // pred_check_branch
          %219 = sbr.rel (%p217) target = $region36
        $region35: #{tpu_custom_call.1} parent=31 // pred_region
          %220 = dma.done [#allocation4], 128
        $region36: #{tpu_custom_call.1} parent=31 // pred_fallthru
          _
        %s221 = sand.u32 %s78, 1
        %s222 = scalar_lea.sflag [#allocation7], %s221
        %s223 = sand.u32 %s78, 1
        %s224 = smul.addr %s223, 16
        %s225 = scalar_lea.vmem [#allocation6], %s224
        // Predicated region
        $region37: #{tpu_custom_call.1} parent=31 // pred_check
          %p226 = pneg %p91
        $region38: #{tpu_custom_call.1} parent=31 // pred_check_branch
          %228 = sbr.rel (%p226) target = $region40
        $region39: #{tpu_custom_call.1} parent=31 // pred_region
          %229 = dma.done %s222, 256
        $region40: #{tpu_custom_call.1} parent=31 // pred_fallthru
          _
        %p230 = pneg %p63
        %p231 = pneg %p60
        %s232 = sand.u32 %s78, 1
        %s233 = scalar_lea.sflag [#allocation7], %s232
        %s234 = sand.u32 %s78, 1
        %s235 = smul.addr %s234, 16
        %s236 = scalar_lea.vmem [#allocation6], %s235
        %p237 = pneg %p91
        %p238 = pneg %p88
        %p239 = scmp.lt.s32.totalorder %s27, 2
        %s240 = scalar_select %p239, %s27, 2
        %s241 = scalar_lea.vmem %s2, %s240
        %p242 = pneg %p117
        %p243 = pneg %p114
        %p244 = pneg %p145
        %p245 = pneg %p142
        %s246 = sand.u32 %s132, 1
        %s247 = scalar_lea.sflag [#allocation5], %s246
        %s248 = sand.u32 %s132, 1
        %s249 = smul.addr %s248, 8
        %s250 = scalar_lea.vmem [#allocation8], %s249
        %s251 = smul.u32 2, %s26
        %s252 = smul.u32 4, %s28
        %p253 = scmp.lt.s32.totalorder %s27, 2
        %s254 = scalar_select %p253, %s27, 2
        %s255 = scalar_lea.vmem %s2, %s254
        %s256 = smul.u32 2, %s26
        %p258 = scmp.eq.s32.totalorder %s28, 0
        // Predicated region
        $region41: #{tpu_custom_call.1} parent=31 // pred_check
          %p259 = pneg %p258
        $region42: #{tpu_custom_call.1} parent=31 // pred_check_branch
          %261 = sbr.rel (%p259) target = $region44
        $region43: #{tpu_custom_call.1} parent=31 // pred_region
          %vm262 = vcmask 261120
          %263 = vst.msk [vmem:[#allocation2] sm:$0xff] %vm262, 0.0
          %264 = vst.msk [vmem:[#allocation2 + $0x8] sm:$0xff] %vm262, 0.0
        $region44: #{tpu_custom_call.1} parent=31 // pred_fallthru
          _
        %v265 = vld [vmem:[#allocation2] sm:$0xff]
        %v266 = vld [vmem:[#allocation2 + $0x8] sm:$0xff]
        %v267 = vld [vmem:[#allocation3] sm:$0xf]
        %v268 = vld [vmem:[#allocation3 + $0x4] sm:$0xf]
        %v269 = vld [vmem:[%s225] sm:$0xf]
        %v270 = vld [vmem:[%s225 + $0x4] sm:$0xf]
        %v271 = vld [vmem:[%s225 + $0x8] sm:$0xf]
        %v272 = vld [vmem:[%s225 + $0xc] sm:$0xf]
        %v275 = vunpack.c.l.b16 %v267
        %v276 = vunpack.c.l.b16 %v268
        %v277 = vpack.c.b16 %v276, %v275
        %v282 = vunpack.c.l.b16 %v269
        %v283 = vunpack.c.l.b16 %v270
        %v284 = vunpack.c.l.b16 %v271
        %v285 = vunpack.c.l.b16 %v272
        %v286 = vpack.c.b16 %v283, %v282
        %v287 = vpack.c.b16 %v285, %v284
        %vm290 = vcmask 261120
        %v292 = vsel %vm290, %v277, 0
        %294 = vmatprep.subr.bf16.mxu0 0
        %295 = vmatpush1.bf16.msra.mxu0 0
        %296 = vmatprep.subr.bf16.mxu0 0
        %297 = vmatpush1.bf16.msra.mxu0 0
        %298 = vmatprep.subr.bf16.mxu0 0
        %299 = vmatpush1.bf16.msra.mxu0 0
        %300 = vmatprep.subr.bf16.mxu0 0
        %301 = vmatpush1.bf16.msra.mxu0 0
        %302 = vmatprep.subr.bf16.mxu0 0
        %303 = vmatpush1.bf16.msra.mxu0 0
        %304 = vmatprep.subr.bf16.mxu0 0
        %305 = vmatpush1.bf16.msra.mxu0 0
        %306 = vmatprep.subr.bf16.mxu0 0
        %307 = vmatpush1.bf16.msra.mxu0 %v287
        %308 = vmatprep.subr.bf16.mxu0 0
        %309 = vmatpush1.bf16.msra.mxu0 %v286
        %310 = vmatprep.subr.bf16.mxu0 0
        %311 = vmatpush2.bf16.msra.mxu0 0
        %312 = vmatprep.subr.bf16.mxu0 0
        %313 = vmatpush2.bf16.msra.mxu0 0
        %314 = vmatprep.subr.bf16.mxu0 0
        %315 = vmatpush2.bf16.msra.mxu0 0
        %316 = vmatprep.subr.bf16.mxu0 0
        %317 = vmatpush2.bf16.msra.mxu0 0
        %318 = vmatprep.subr.bf16.mxu0 0
        %319 = vmatpush2.bf16.msra.mxu0 0
        %320 = vmatprep.subr.bf16.mxu0 0
        %321 = vmatpush2.bf16.msra.mxu0 0
        %322 = vmatprep.subr.bf16.mxu0 0
        %323 = vmatpush2.bf16.msra.mxu0 0
        %324 = vmatprep.subr.bf16.mxu0 0
        %325 = vmatpush2.bf16.msra.mxu0 0
        %326 = vmatprep.mubr.bf16.mxu0 0
        %327 = vmatmul.mubr.bf16.gmra.mxu0 %v292
        %v328 = vpop.f32.mrf.mxu0
        %v329 = vadd.f32 0.0, %v328
        %v330 = vpop.f32.mrf.mxu0
        %v331 = vpop.f32.mrf.mxu0
        %v332 = vadd.f32 0.0, %v331
        %v333 = vpop.f32.mrf.mxu0
        %334 = vdwg.mxu0
        %v335 = vadd.f32 %v265, %v329
        %v336 = vadd.f32 %v266, %v332
        %337 = vst.msk [vmem:[#allocation2] sm:$0xff] %vm290, %v335
        %338 = vst.msk [vmem:[#allocation2 + $0x8] sm:$0xff] %vm290, %v336
        // Predicated region
        $region45: #{tpu_custom_call.1} parent=31 // pred_check
          %p339 = pneg %p258
        $region46: #{tpu_custom_call.1} parent=31 // pred_check_branch
          %341 = sbr.rel (%p339) target = $region48
        $region47: #{tpu_custom_call.1} parent=31 // pred_region
          %v342 = vld [vmem:[#allocation2] sm:$0xff]
          %v343 = vld [vmem:[#allocation2 + $0x8] sm:$0xff]
          %v344 = vld [vmem:[%s255] sm:$0x1]
          %v346 = vlaneseq
          %v347 = vshrl.u32 %v346, 7
          %v348 = vsub.s32 0, %v347
          %v349 = vrot.slane %v344, %v348
          %v351 = vadd.f32 %v342, %v349
          %v352 = vadd.f32 %v343, %v349
          %v353 = vpack.c.bf16 %v352, %v351
          %v355 = vunpack.c.l.b16 %v353
          %v356 = vunpack.c.h.b16 %v353
          %v357 = vpack.c.b16 %v355, %v355
          %v358 = vpack.c.b16 %v356, %v356
          %vm361 = vcmask 257024
          %362 = vst.msk [vmem:[%s250] sm:$0xf] %vm361, %v357
          %363 = vst.msk [vmem:[%s250 + $0x4] sm:$0xf] %vm361, %v358
        $region48: #{tpu_custom_call.1} parent=31 // pred_fallthru
          _
        %s364 = sand.u32 %s132, 1
        %s365 = scalar_lea.sflag [#allocation5], %s364
        %s366 = sand.u32 %s132, 1
        %s367 = smul.addr %s366, 8
        %s368 = scalar_lea.vmem [#allocation8], %s367
        // Predicated region
        $region49: #{tpu_custom_call.1} parent=31 // pred_check
          %p369 = pneg %p142
        $region50: #{tpu_custom_call.1} parent=31 // pred_check_branch
          %371 = sbr.rel (%p369) target = $region52
        $region51: #{tpu_custom_call.1} parent=31 // pred_region
          %s372 = smul.u32 2, %s26
          %s374 = ssub.s32 128, 128
          %375 = vsyncadd %s365, %s374
          %s376 = smul.addr %s27, 2
          %s377 = sadd.s32 %s372, %s376
          %s378 = smul.addr %s377, 64
          %s379 = scalar_lea.hbm %s3, %s378
          %s380 = sshll.u32 %s368, 4
          %s381 = int_to_ptr.vmem [resolvable:$true] %s380
          %386 = dma.vmem_to_hbm [thread:$0]  %s381, 128, %s379, %s365, 64, 64, 4
        $region52: #{tpu_custom_call.1} parent=31 // pred_fallthru
          _
      $region32: #{tpu_custom_call.1} parent=5 // pred_fallthru
        _
      %p387 = scmp.le.s32.totalorder 2, %s16
      // Predicated region
      $region53: #{tpu_custom_call.1} parent=5 // pred_check
        %p388 = pneg %p387
      $region54: #{tpu_custom_call.1} parent=5 // pred_check_branch
        %390 = sbr.rel (%p388) target = $region56
      $region55: #{tpu_custom_call.1} parent=5 // pred_region
        %s391 = ssub.s32 %s16, 2
        // Predicated region
        $region57: #{tpu_custom_call.1} parent=55 // pred_check
          %p392 = pneg %p148
        $region58: #{tpu_custom_call.1} parent=55 // pred_check_branch
          %394 = sbr.rel (%p392) target = $region60
        $region59: #{tpu_custom_call.1} parent=55 // pred_region
          %s395 = sand.u32 %s133, 1
          %s396 = scalar_lea.sflag [#allocation5], %s395
          %s397 = sand.u32 %s133, 1
          %s398 = smul.addr %s397, 8
          %s399 = scalar_lea.vmem [#allocation8], %s398
          %400 = dma.done %s396, 128
        $region60: #{tpu_custom_call.1} parent=55 // pred_fallthru
          _
      $region56: #{tpu_custom_call.1} parent=5 // pred_fallthru
        _
    $region6: #{tpu_custom_call.1} parent=1 // loop_footer
      %s20 = sadd.s32 1, %s16
    $region7: #{tpu_custom_call.1} parent=1 // loop_footer_branch
      %15 = sbr.rel target = $region3
    $region8: #{tpu_custom_call.1} parent=1 // loop_exit
      _
    %401 = vsyncpa [#allocation4], 1
    %s402 = scalar_lea.sflag [#allocation4], 1
    %403 = vsyncpa %s402, 1
    %404 = vsyncpa [#allocation7], 1
    %s405 = scalar_lea.sflag [#allocation7], 1
    %406 = vsyncpa %s405, 1
    %407 = vsyncpa [#allocation5], 1
    %s408 = scalar_lea.sflag [#allocation5], 1
    %409 = vsyncpa %s408, 1

</llo_original>
